<compile_context>
chip_gen: v7x
topology: tpu7x:2x2x1
jax: 0.10.0
libtpu: 0.0.40
codegen_flags: <defaults>
</compile_context>

<pallas_src>
import math

import jax
import jax.numpy as jnp
from jax import lax
from jax.experimental import pallas as pl
from jax.experimental.pallas import tpu as pltpu

# ---- static hyper-parameters (the fields of `opt` used by the forward pass) ----
DIM = 32          # opt.hiddenSize
HOP = 2           # opt.g_iter
N_ITER = 2        # opt.n_iter (local/mirror iterations)
N_SAMPLE = 4      # opt.n_sample
MU = 0.5          # opt.mu
TEMP = 0.1        # opt.temp
NUM_NODE = 64     # num_node
POS_MAX = 200     # pos_embedding rows

LANE = 128        # item axis padded to a multiple of this (lane-dense stores)

_VMEM = pl.BlockSpec(memory_space=pltpu.MemorySpace.VMEM)


# ----------------------------- Pallas kernels -----------------------------
def _prologue_kernel(h_ref, x_ref, hg_ref, pos_ref, mask_ref, last_ref,
                     hw_ref, glu1_ref, glu2_ref, glu4_ref, glu4b_ref,
                     watt_ref, gate_ref, zh_ref):
    """Highway combine + GLU attention + gated fusion -> zh (B, D).

    Runs exactly once (no grid), hoisted out of the item-streaming score kernel so the
    gridded call below is a pure HBM item stream (the actual roofline).
    """
    B, L, D = h_ref.shape
    h = h_ref[...]
    x = x_ref[...]
    mask = mask_ref[...]          # (B, L) float — broadcast in-kernel, no lane-1 tensors
    last = last_ref[...]          # (B, L) float one-hot of the last item

    # --- highway: g = sigmoid([h, x] @ W_hw); x_dot = g*h + (1-g)*x ---
    h2 = h.reshape(B * L, D)
    x2 = x.reshape(B * L, D)
    g = jax.nn.sigmoid(
        jnp.dot(h2, hw_ref[0:D, :], preferred_element_type=jnp.float32)
        + jnp.dot(x2, hw_ref[D:2 * D, :], preferred_element_type=jnp.float32))
    x_dot = (g * h2 + (1.0 - g) * x2).reshape(B, L, D)
    # masked_select with a one-hot last-item mask == one-hot-weighted sum over seq
    # (assumes exactly one True per row, matching the reference's reshape semantics)
    h_local = jnp.sum(x_dot * last[:, :, None], axis=1)                    # (B, D)

    # --- hs = sum(h_global * mask, -2) / sum(mask, 1) (guarded against all-padded rows) ---
    denom = jnp.maximum(jnp.sum(mask, axis=1, keepdims=True), 1.0)
    hs = jnp.sum(hg_ref[...] * mask[:, :, None], axis=1) / denom           # (B, D)

    # --- GLU attention ---
    hp = x_dot + pos_ref[...][None, :, :]                                  # (B, L, D)
    t_p = jnp.dot(hp.reshape(B * L, D), glu1_ref[...],
                  preferred_element_type=jnp.float32).reshape(B, L, D)
    t_g = jnp.dot(hs, glu2_ref[...], preferred_element_type=jnp.float32)   # (B, D)
    t_l = (jnp.dot(h_local, glu4_ref[...], preferred_element_type=jnp.float32)
           + glu4b_ref[...])                                               # (B, D)
    nh = jax.nn.sigmoid(t_p + (t_g + t_l)[:, None, :])

    # attention score: (D,1) matmul replaced by VPU multiply + lane reduce (keeps MXU free,
    # never materializes a lane-1 (B,L,1) tensor)
    beta = jnp.sum(nh * watt_ref[...][None, :, :], axis=-1) * mask         # (B, L)
    zg = jnp.sum(beta[:, :, None] * hp, axis=1)                            # (B, D)

    # --- gated fusion: gate(cat([zg, h_local])) as split-weight matmuls ---
    gf = jax.nn.sigmoid(
        jnp.dot(zg, gate_ref[0:D, :], preferred_element_type=jnp.float32)
        + jnp.dot(h_local, gate_ref[D:2 * D, :], preferred_element_type=jnp.float32)) * MU
    zh = gf * h_local + (1.0 - gf) * zg                                    # (B, D)
    # F.dropout(zh, dropout_score, training=False) -> identity (eval mode)
    zh_ref[...] = zh


def _score_kernel(zh_ref, items_t_ref, scores_ref):
    """scores tile = zh @ items_T_tile.

    items_t is (D, tile_n) bf16 (lane axis = items): fully lane-dense tiles, MXU-ready
    ((1,),(0,)) contraction, lane-dense (B, tile_n) f32 output store.  zh is a tiny constant
    block cast to bf16 at the matmul; accumulation stays f32.
    """
    scores_ref[...] = jnp.dot(zh_ref[...].astype(jnp.bfloat16), items_t_ref[...],
                              preferred_element_type=jnp.float32)


# ----------------------------- kernel wrappers -----------------------------
def _pick_tile_n(n_pad):
    """Largest tile that (preferably) leaves an even >=2-step grid (v7x megacore split)."""
    candidates = (8192, 4096, 2048, 1024, 512, 256, 128)
    for t in candidates:
        steps = n_pad // t
        if n_pad % t == 0 and steps >= 2 and steps % 2 == 0:
            return t
    for t in candidates:
        if n_pad % t == 0:
            return t
    return n_pad  # n_pad is always a multiple of LANE=128, so never reached


def prepare_item_table(params):
    """Pre-pad to a 128-multiple, pre-transpose to (D, n_pad), pre-cast to bf16 — ONCE.

    Avoids re-padding/re-transposing/re-casting E[1:] on every forward (that copy can exceed
    the score kernel's own HBM traffic at real catalog sizes).
    """
    items = params['embedding'][1:]                                  # (N-1, D)
    n_items = items.shape[0]
    n_pad = ((n_items + LANE - 1) // LANE) * LANE
    items_t = jnp.pad(items, ((0, n_pad - n_items), (0, 0))).T.astype(jnp.bfloat16)  # (D, n_pad)
    return items_t, n_items


def compute_zh(h, x, h_global, pos_emb, mask_f, last_f, params):
    """One tiny pallas_call (no grid): prologue -> zh (B, D) f32."""
    B, L, D = h.shape
    return pl.pallas_call(
        _prologue_kernel,
        out_shape=jax.ShapeDtypeStruct((B, D), jnp.float32),
        in_specs=[_VMEM] * 13,
        out_specs=_VMEM,
    )(h, x, h_global, pos_emb, mask_f, last_f,
      params['highway_w'], params['glu1_w'], params['glu2_w'], params['glu4_w'],
      params['glu4_b'], params['w_att'].reshape(1, D), params['gate_w'])


def item_scores(zh, items_t):
    """Gridded (parallel) item-score stream over the padded item axis."""
    B, D = zh.shape
    n_pad = items_t.shape[1]
    tile_n = _pick_tile_n(n_pad)
    grid = (n_pad // tile_n,)
    # VMEM footprint: a few MiB even at tile_n=8192 -> leave the default VMEM limit.
    return pl.pallas_call(
        _score_kernel,
        grid=grid,
        out_shape=jax.ShapeDtypeStruct((B, n_pad), jnp.float32),
        in_specs=[pl.BlockSpec((B, D), lambda n: (0, 0)),            # zh (tiny constant block)
                  pl.BlockSpec((D, tile_n), lambda n: (0, n))],      # item tile, streamed
        out_specs=pl.BlockSpec((B, tile_n), lambda n: (0, n)),       # lane-dense score tile
        compiler_params=pltpu.CompilerParams(
            dimension_semantics=("parallel",)),                      # item tiles split over TCs
    )(zh, items_t)


def similarity_loss(hf1, hf2, simi_mask):
    """similarity_loss — tiny (B,K,K) op left to XLA fusion per perf review (fixed-cost
    Pallas launch + padded blocks were pure overhead at this size)."""
    sim = jnp.einsum('bkd,bjd->bkj', hf1, hf2,
                     preferred_element_type=jnp.float32) / TEMP
    loss = -jnp.log(jax.nn.softmax(sim, axis=2) + 1e-8)
    msk = (simi_mask == 1).astype(jnp.float32)
    loss = jnp.sum(loss * msk, axis=2)
    loss = jnp.sum(loss, axis=1)
    return jnp.mean(loss)


# ----------------------------- parameters -----------------------------
def init_params(key):
    stdv = 1.0 / math.sqrt(DIM)
    keys = jax.random.split(key, 11)
    u = lambda k, shape: jax.random.uniform(k, shape, jnp.float32, -stdv, stdv)
    return {
        'embedding': u(keys[0], (NUM_NODE, DIM)),
        'pos_embedding': u(keys[1], (POS_MAX, DIM)),
        'highway_w': u(keys[2], (2 * DIM, DIM)),     # Linear(2D, D, bias=False), stored (in, out)
        'glu1_w': u(keys[3], (DIM, DIM)),
        'glu2_w': u(keys[4], (DIM, DIM)),
        'glu4_w': u(keys[5], (DIM, DIM)),
        'glu4_b': u(keys[6], (1, DIM)),
        'w_att': u(keys[7], (DIM, 1)),
        'gate_w': u(keys[8], (2 * DIM, DIM)),
        # buffers
        'adj_all': jax.random.randint(keys[9], (NUM_NODE, N_SAMPLE), 0, NUM_NODE),
        'num': jax.random.uniform(keys[10], (NUM_NODE, N_SAMPLE), jnp.float32, 0.0, 1.0),
    }


# ----------------------------- forward pass -----------------------------
def combine_graph_forward(params, inputs, adj, last_item_mask,
                          as_items, as_items_ssl, simi_mask, item,
                          items_t, n_items):
    E = params['embedding']
    B, L = inputs.shape
    mask_item = inputs != 0
    mask_f = mask_item.astype(jnp.float32)

    h = E[inputs]                                             # (B, L, D)

    # --- attribute branch ---
    # TODO(synk): AttributeAggregator is not defined in the reference; deterministic stand-in =
    # masked mean of the attribute-neighbor embeddings per attribute.
    def masked_mean(ids):
        emb = E[ids]
        m = (ids != 0).astype(jnp.float32)[..., None]
        return jnp.sum(emb * m, axis=1) / jnp.maximum(jnp.sum(m, axis=1), 1.0)

    hf_1 = jnp.stack([masked_mean(a) for a in as_items], axis=1)       # (B, K, D)
    hf_2 = jnp.stack([masked_mean(a) for a in as_items_ssl], axis=1)   # (B, K, D)
    hf = h  # TODO(synk): mirror-node initialization stand-in (h_mirror is unused by compute_score)

    # --- global branch (neighbor sampling exactly as the reference) ---
    item_neighbors = [inputs]
    weight_neighbors = []
    support = L
    for _ in range(HOP):
        flat = item_neighbors[-1].reshape(-1)
        item_neighbors.append(params['adj_all'][flat].reshape(B, support * N_SAMPLE))
        weight_neighbors.append(params['num'][flat].reshape(B, support * N_SAMPLE))
        support *= N_SAMPLE
    entity_vectors = [E[iv] for iv in item_neighbors]

    item_emb = E[item] * mask_f[..., None]
    sum_item_emb = jnp.sum(item_emb, axis=1) / jnp.maximum(
        jnp.sum(mask_f, axis=-1, keepdims=True), 1.0)
    sum_item_emb = sum_item_emb[:, None, :]
    session_info = [jnp.broadcast_to(sum_item_emb, (B, entity_vectors[i].shape[1], DIM))
                    for i in range(HOP)]

    # TODO(synk): GlobalAggregator weights/activation not given in the reference; stand-in =
    # softmax(neighbor_weight)-weighted neighbor mean fused with self + session info via tanh.
    for n_hop in range(HOP):
        nxt = []
        for hp_i in range(HOP - n_hop):
            sv = entity_vectors[hp_i]
            nv = entity_vectors[hp_i + 1].reshape(B, -1, N_SAMPLE, DIM)
            nw = weight_neighbors[hp_i].reshape(B, -1, N_SAMPLE)
            alpha = jax.nn.softmax(nw, axis=-1)[..., None]
            nxt.append(jnp.tanh(sv + jnp.sum(alpha * nv, axis=2) + session_info[hp_i]))
        entity_vectors = nxt
    h_global = entity_vectors[0].reshape(B, L, DIM)
    # F.dropout(h_global, dropout_global, training=False) -> identity

    # --- local / mirror branch ---
    # TODO(synk): LocalAggregator / MirrorAggregator not defined in the reference; stand-in =
    # row-normalized adjacency propagation with mirror pass-through.
    x = h
    for _ in range(N_ITER):
        deg = jnp.maximum(jnp.sum(adj, axis=-1, keepdims=True), 1e-6)
        x = jnp.einsum('bij,bjd->bid', adj, x) / deg
        x = x * mask_f[..., None]

    # --- prologue (one tiny pallas_call) -> zh, then gridded item-score stream ---
    pos_emb = params['pos_embedding'][:L]                     # (L, D)
    last_f = last_item_mask.astype(jnp.float32)               # (B, L)

    zh = compute_zh(h, x, h_global, pos_emb, mask_f, last_f, params)    # (B, D) f32
    scores_pad = item_scores(zh, items_t)                                # (B, n_pad) f32
    scores = scores_pad[:, :n_items]

    # --- SSL loss (left to XLA; see similarity_loss) ---
    simi_loss = similarity_loss(hf_1, hf_2, simi_mask)
    return simi_loss, scores


# ----------------------------- demo -----------------------------
if __name__ == "__main__":
    key = jax.random.PRNGKey(0)
    pkey, ikey, akey, skey = jax.random.split(key, 4)
    params = init_params(pkey)
    # item table prepared ONCE (pre-padded, pre-transposed to (D, n_pad), bf16)
    items_t, n_items = prepare_item_table(params)

    B, L, K, M = 2, 8, 3, 6
    inputs = jax.random.randint(ikey, (B, L), 1, NUM_NODE)
    inputs = inputs.at[1, 6:].set(0)                         # pad tail of second sequence
    item = inputs
    adj = jax.random.uniform(akey, (B, L, L), jnp.float32, 0.0, 1.0)
    last_item_mask = (jnp.zeros((B, L), dtype=bool)
                      .at[0, L - 1].set(True)
                      .at[1, 5].set(True))
    as_keys = jax.random.split(skey, 2 * K)
    as_items = [jax.random.randint(as_keys[k], (B, M), 1, NUM_NODE) for k in range(K)]
    as_items_ssl = [jax.random.randint(as_keys[K + k], (B, M), 1, NUM_NODE) for k in range(K)]
    simi_mask = jnp.broadcast_to(jnp.eye(K, dtype=jnp.float32), (B, K, K))

    simi_loss, scores = combine_graph_forward(params, inputs, adj, last_item_mask,
                                              as_items, as_items_ssl, simi_mask, item,
                                              items_t, n_items)
    jax.block_until_ready((simi_loss, scores))
    assert scores.shape == (B, NUM_NODE - 1)
    assert simi_loss.shape == ()
    print("KERNEL_OK")
</pallas_src>

<mosaic_0001>
module attributes {stable_mosaic.version = 11 : i64} {
  func.func @_prologue_kernel(%arg0: memref<2x8x32xf32, #tpu.memory_space<vmem>>, %arg1: memref<2x8x32xf32, #tpu.memory_space<vmem>>, %arg2: memref<2x8x32xf32, #tpu.memory_space<vmem>>, %arg3: memref<8x32xf32, #tpu.memory_space<vmem>>, %arg4: memref<2x8xf32, #tpu.memory_space<vmem>>, %arg5: memref<2x8xf32, #tpu.memory_space<vmem>>, %arg6: memref<64x32xf32, #tpu.memory_space<vmem>>, %arg7: memref<32x32xf32, #tpu.memory_space<vmem>>, %arg8: memref<32x32xf32, #tpu.memory_space<vmem>>, %arg9: memref<32x32xf32, #tpu.memory_space<vmem>>, %arg10: memref<1x32xf32, #tpu.memory_space<vmem>>, %arg11: memref<1x32xf32, #tpu.memory_space<vmem>>, %arg12: memref<64x32xf32, #tpu.memory_space<vmem>>, %arg13: memref<2x32xf32, #tpu.memory_space<vmem>>) attributes {dimension_semantics = [], scalar_prefetch = 0 : i64, scratch_operands = 0 : i64, tpu.core_type = #tpu.core_type<tc>} {
    %c0 = arith.constant 0 : index
    %c0_0 = arith.constant 0 : index
    %c0_1 = arith.constant 0 : index
    %0 = vector.load %arg0[%c0, %c0_0, %c0_1] : memref<2x8x32xf32, #tpu.memory_space<vmem>>, vector<2x8x32xf32>
    %c0_2 = arith.constant 0 : index
    %c0_3 = arith.constant 0 : index
    %c0_4 = arith.constant 0 : index
    %1 = vector.load %arg1[%c0_2, %c0_3, %c0_4] : memref<2x8x32xf32, #tpu.memory_space<vmem>>, vector<2x8x32xf32>
    %c0_5 = arith.constant 0 : index
    %c0_6 = arith.constant 0 : index
    %2 = vector.load %arg4[%c0_5, %c0_6] : memref<2x8xf32, #tpu.memory_space<vmem>>, vector<2x8xf32>
    %c0_7 = arith.constant 0 : index
    %c0_8 = arith.constant 0 : index
    %3 = vector.load %arg5[%c0_7, %c0_8] : memref<2x8xf32, #tpu.memory_space<vmem>>, vector<2x8xf32>
    %4 = vector.shape_cast %0 : vector<2x8x32xf32> to vector<16x32xf32>
    %5 = vector.shape_cast %1 : vector<2x8x32xf32> to vector<16x32xf32>
    %c0_9 = arith.constant 0 : index
    %c0_10 = arith.constant 0 : index
    %6 = vector.load %arg6[%c0_9, %c0_10] : memref<64x32xf32, #tpu.memory_space<vmem>>, vector<32x32xf32>
    %cst = arith.constant dense<0.000000e+00> : vector<16x32xf32>
    %7 = tpu.matmul %4, %6, %cst {dimension_numbers = #tpu.dot_dimension_numbers<[1], [0], [0], [1], [0, 0, 1, 1], [], []>} : vector<16x32xf32>, vector<32x32xf32>, vector<16x32xf32> -> vector<16x32xf32>
    %c32 = arith.constant 32 : index
    %c0_11 = arith.constant 0 : index
    %8 = vector.load %arg6[%c32, %c0_11] : memref<64x32xf32, #tpu.memory_space<vmem>>, vector<32x32xf32>
    %cst_12 = arith.constant dense<0.000000e+00> : vector<16x32xf32>
    %9 = tpu.matmul %5, %8, %cst_12 {dimension_numbers = #tpu.dot_dimension_numbers<[1], [0], [0], [1], [0, 0, 1, 1], [], []>} : vector<16x32xf32>, vector<32x32xf32>, vector<16x32xf32> -> vector<16x32xf32>
    %10 = arith.addf %7, %9 : vector<16x32xf32>
    %11 = arith.negf %10 : vector<16x32xf32>
    %12 = math.exp %11 : vector<16x32xf32>
    %cst_13 = arith.constant 1.000000e+00 : f32
    %13 = vector.broadcast %cst_13 : f32 to vector<16x32xf32>
    %14 = arith.addf %13, %12 : vector<16x32xf32>
    %15 = arith.divf %13, %14 : vector<16x32xf32>
    %16 = arith.mulf %15, %4 : vector<16x32xf32>
    %cst_14 = arith.constant 1.000000e+00 : f32
    %17 = vector.broadcast %cst_14 : f32 to vector<16x32xf32>
    %18 = arith.subf %17, %15 : vector<16x32xf32>
    %19 = arith.mulf %18, %5 : vector<16x32xf32>
    %20 = arith.addf %16, %19 : vector<16x32xf32>
    %21 = vector.shape_cast %20 : vector<16x32xf32> to vector<2x8x32xf32>
    %22 = vector.shape_cast %3 : vector<2x8xf32> to vector<2x8x1xf32>
    %23 = vector.broadcast %22 : vector<2x8x1xf32> to vector<2x8x32xf32>
    %24 = arith.mulf %21, %23 : vector<2x8x32xf32>
    %cst_15 = arith.constant dense<0.000000e+00> : vector<2x32xf32>
    %25 = vector.multi_reduction <add>, %24, %cst_15 [1] : vector<2x8x32xf32> to vector<2x32xf32>
    %cst_16 = arith.constant dense<0.000000e+00> : vector<2xf32>
    %26 = vector.multi_reduction <add>, %2, %cst_16 [1] : vector<2x8xf32> to vector<2xf32>
    %27 = vector.shape_cast %26 : vector<2xf32> to vector<2x1xf32>
    %cst_17 = arith.constant 1.000000e+00 : f32
    %28 = vector.broadcast %cst_17 : f32 to vector<2x1xf32>
    %29 = arith.maximumf %27, %28 : vector<2x1xf32>
    %c0_18 = arith.constant 0 : index
    %c0_19 = arith.constant 0 : index
    %c0_20 = arith.constant 0 : index
    %30 = vector.load %arg2[%c0_18, %c0_19, %c0_20] : memref<2x8x32xf32, #tpu.memory_space<vmem>>, vector<2x8x32xf32>
    %31 = vector.shape_cast %2 : vector<2x8xf32> to vector<2x8x1xf32>
    %32 = vector.broadcast %31 : vector<2x8x1xf32> to vector<2x8x32xf32>
    %33 = arith.mulf %30, %32 : vector<2x8x32xf32>
    %cst_21 = arith.constant dense<0.000000e+00> : vector<2x32xf32>
    %34 = vector.multi_reduction <add>, %33, %cst_21 [1] : vector<2x8x32xf32> to vector<2x32xf32>
    %35 = vector.broadcast %29 : vector<2x1xf32> to vector<2x32xf32>
    %36 = arith.divf %34, %35 : vector<2x32xf32>
    %c0_22 = arith.constant 0 : index
    %c0_23 = arith.constant 0 : index
    %37 = vector.load %arg3[%c0_22, %c0_23] : memref<8x32xf32, #tpu.memory_space<vmem>>, vector<8x32xf32>
    %38 = vector.shape_cast %37 : vector<8x32xf32> to vector<1x8x32xf32>
    %39 = vector.broadcast %38 : vector<1x8x32xf32> to vector<2x8x32xf32>
    %40 = arith.addf %21, %39 : vector<2x8x32xf32>
    %41 = vector.shape_cast %40 : vector<2x8x32xf32> to vector<16x32xf32>
    %c0_24 = arith.constant 0 : index
    %c0_25 = arith.constant 0 : index
    %42 = vector.load %arg7[%c0_24, %c0_25] : memref<32x32xf32, #tpu.memory_space<vmem>>, vector<32x32xf32>
    %cst_26 = arith.constant dense<0.000000e+00> : vector<16x32xf32>
    %43 = tpu.matmul %41, %42, %cst_26 {dimension_numbers = #tpu.dot_dimension_numbers<[1], [0], [0], [1], [0, 0, 1, 1], [], []>} : vector<16x32xf32>, vector<32x32xf32>, vector<16x32xf32> -> vector<16x32xf32>
    %44 = vector.shape_cast %43 : vector<16x32xf32> to vector<2x8x32xf32>
    %c0_27 = arith.constant 0 : index
    %c0_28 = arith.constant 0 : index
    %45 = vector.load %arg8[%c0_27, %c0_28] : memref<32x32xf32, #tpu.memory_space<vmem>>, vector<32x32xf32>
    %cst_29 = arith.constant dense<0.000000e+00> : vector<2x32xf32>
    %46 = tpu.matmul %36, %45, %cst_29 {dimension_numbers = #tpu.dot_dimension_numbers<[1], [0], [0], [1], [0, 0, 1, 1], [], []>} : vector<2x32xf32>, vector<32x32xf32>, vector<2x32xf32> -> vector<2x32xf32>
    %c0_30 = arith.constant 0 : index
    %c0_31 = arith.constant 0 : index
    %47 = vector.load %arg9[%c0_30, %c0_31] : memref<32x32xf32, #tpu.memory_space<vmem>>, vector<32x32xf32>
    %cst_32 = arith.constant dense<0.000000e+00> : vector<2x32xf32>
    %48 = tpu.matmul %25, %47, %cst_32 {dimension_numbers = #tpu.dot_dimension_numbers<[1], [0], [0], [1], [0, 0, 1, 1], [], []>} : vector<2x32xf32>, vector<32x32xf32>, vector<2x32xf32> -> vector<2x32xf32>
    %c0_33 = arith.constant 0 : index
    %c0_34 = arith.constant 0 : index
    %49 = vector.load %arg10[%c0_33, %c0_34] : memref<1x32xf32, #tpu.memory_space<vmem>>, vector<1x32xf32>
    %50 = vector.broadcast %49 : vector<1x32xf32> to vector<2x32xf32>
    %51 = arith.addf %48, %50 : vector<2x32xf32>
    %52 = arith.addf %46, %51 : vector<2x32xf32>
    %53 = vector.shape_cast %52 : vector<2x32xf32> to vector<2x1x32xf32>
    %54 = vector.broadcast %53 : vector<2x1x32xf32> to vector<2x8x32xf32>
    %55 = arith.addf %44, %54 : vector<2x8x32xf32>
    %56 = arith.negf %55 : vector<2x8x32xf32>
    %57 = math.exp %56 : vector<2x8x32xf32>
    %cst_35 = arith.constant 1.000000e+00 : f32
    %58 = vector.broadcast %cst_35 : f32 to vector<2x8x32xf32>
    %59 = arith.addf %58, %57 : vector<2x8x32xf32>
    %60 = arith.divf %58, %59 : vector<2x8x32xf32>
    %c0_36 = arith.constant 0 : index
    %c0_37 = arith.constant 0 : index
    %61 = vector.load %arg11[%c0_36, %c0_37] : memref<1x32xf32, #tpu.memory_space<vmem>>, vector<1x32xf32>
    %62 = vector.shape_cast %61 : vector<1x32xf32> to vector<1x1x32xf32>
    %63 = vector.broadcast %62 : vector<1x1x32xf32> to vector<2x8x32xf32>
    %64 = arith.mulf %60, %63 : vector<2x8x32xf32>
    %cst_38 = arith.constant dense<0.000000e+00> : vector<2x8xf32>
    %65 = vector.multi_reduction <add>, %64, %cst_38 [2] : vector<2x8x32xf32> to vector<2x8xf32>
    %66 = arith.mulf %65, %2 : vector<2x8xf32>
    %67 = vector.shape_cast %66 : vector<2x8xf32> to vector<2x8x1xf32>
    %68 = vector.broadcast %67 : vector<2x8x1xf32> to vector<2x8x32xf32>
    %69 = arith.mulf %68, %40 : vector<2x8x32xf32>
    %cst_39 = arith.constant dense<0.000000e+00> : vector<2x32xf32>
    %70 = vector.multi_reduction <add>, %69, %cst_39 [1] : vector<2x8x32xf32> to vector<2x32xf32>
    %c0_40 = arith.constant 0 : index
    %c0_41 = arith.constant 0 : index
    %71 = vector.load %arg12[%c0_40, %c0_41] : memref<64x32xf32, #tpu.memory_space<vmem>>, vector<32x32xf32>
    %cst_42 = arith.constant dense<0.000000e+00> : vector<2x32xf32>
    %72 = tpu.matmul %70, %71, %cst_42 {dimension_numbers = #tpu.dot_dimension_numbers<[1], [0], [0], [1], [0, 0, 1, 1], [], []>} : vector<2x32xf32>, vector<32x32xf32>, vector<2x32xf32> -> vector<2x32xf32>
    %c32_43 = arith.constant 32 : index
    %c0_44 = arith.constant 0 : index
    %73 = vector.load %arg12[%c32_43, %c0_44] : memref<64x32xf32, #tpu.memory_space<vmem>>, vector<32x32xf32>
    %cst_45 = arith.constant dense<0.000000e+00> : vector<2x32xf32>
    %74 = tpu.matmul %25, %73, %cst_45 {dimension_numbers = #tpu.dot_dimension_numbers<[1], [0], [0], [1], [0, 0, 1, 1], [], []>} : vector<2x32xf32>, vector<32x32xf32>, vector<2x32xf32> -> vector<2x32xf32>
    %75 = arith.addf %72, %74 : vector<2x32xf32>
    %76 = arith.negf %75 : vector<2x32xf32>
    %77 = math.exp %76 : vector<2x32xf32>
    %cst_46 = arith.constant 1.000000e+00 : f32
    %78 = vector.broadcast %cst_46 : f32 to vector<2x32xf32>
    %79 = arith.addf %78, %77 : vector<2x32xf32>
    %80 = arith.divf %78, %79 : vector<2x32xf32>
    %cst_47 = arith.constant 5.000000e-01 : f32
    %81 = vector.broadcast %cst_47 : f32 to vector<2x32xf32>
    %82 = arith.mulf %80, %81 : vector<2x32xf32>
    %83 = arith.mulf %82, %25 : vector<2x32xf32>
    %cst_48 = arith.constant 1.000000e+00 : f32
    %84 = vector.broadcast %cst_48 : f32 to vector<2x32xf32>
    %85 = arith.subf %84, %82 : vector<2x32xf32>
    %86 = arith.mulf %85, %70 : vector<2x32xf32>
    %87 = arith.addf %83, %86 : vector<2x32xf32>
    %c0_49 = arith.constant 0 : index
    %c0_50 = arith.constant 0 : index
    %88 = vector.load %arg13[%c0_49, %c0_50] : memref<2x32xf32, #tpu.memory_space<vmem>>, vector<2x32xf32>
    tpu.vector_store %arg13[%c0_49, %c0_50], %87 {strides = array<i32>} : memref<2x32xf32, #tpu.memory_space<vmem>>, vector<2x32xf32>,
    return
  }
}

</mosaic_0001>

<llo_original>
// kernel: tpu_custom_call.1
$region0: #{tpu_custom_call.1}
  #allocation0 [shape = 'u32[]', space=smem, size = 0x4, offset = 0x4, fixed_abs, tag = 'smem constant byte address 0x4 - core index']
  #allocation1 [shape = 'u32[144,128]{1,0:T(1,128)}', space=vmem, size = 0x12000, scoped, tag = 'internal scratch']
  %s0 = inlined_call_operand.vmem [shape: f32[2,8,32], index: 0, kind: input, shape index: {}]
  %s1 = inlined_call_operand.vmem [shape: f32[2,8,32], index: 1, kind: input, shape index: {}]
  %s2 = inlined_call_operand.vmem [shape: f32[2,8,32], index: 2, kind: input, shape index: {}]
  %s3 = inlined_call_operand.vmem [shape: f32[8,32], index: 3, kind: input, shape index: {}]
  %s4 = inlined_call_operand.vmem [shape: f32[2,8], index: 4, kind: input, shape index: {}]
  %s5 = inlined_call_operand.vmem [shape: f32[2,8], index: 5, kind: input, shape index: {}]
  %s6 = inlined_call_operand.vmem [shape: f32[64,32], index: 6, kind: input, shape index: {}]
  %s7 = inlined_call_operand.vmem [shape: f32[32,32], index: 7, kind: input, shape index: {}]
  %s8 = inlined_call_operand.vmem [shape: f32[32,32], index: 8, kind: input, shape index: {}]
  %s9 = inlined_call_operand.vmem [shape: f32[32,32], index: 9, kind: input, shape index: {}]
  %s10 = inlined_call_operand.vmem [shape: f32[1,32], index: 10, kind: input, shape index: {}]
  %s11 = inlined_call_operand.vmem [shape: f32[1,32], index: 11, kind: input, shape index: {}]
  %s12 = inlined_call_operand.vmem [shape: f32[64,32], index: 12, kind: input, shape index: {}]
  %s13 = inlined_call_operand.hbm [shape: f32[2,32], index: 13, kind: output, shape index: {}]
  %s14 = sld [smem:[#allocation0]]
  $region62: #{tpu_custom_call.1} parent=0
    _
  %s16 = ssub.s32 1, %s14
  %s17 = scalar_select 0, %s16, %s14
  $region1: #{tpu_custom_call.1} parent=0
    #allocation2 [shape = 'u8[1024]{0}', space=vmem, size = 0x400, scoped, tag = 'output window, operand 0, single buffered']
    #allocation3 [shape = 's32[1]{0}', space=sflag, size = 0x4, scoped, tag = 'scoped memory for tpu_custom_call.1']
    %18 = vsyncpa [#allocation3], 0
    // Predicated region
    $region2: #{tpu_custom_call.1} parent=1 // pred_check
      _
    $region3: #{tpu_custom_call.1} parent=1 // pred_check_branch
      %20 = sbr.rel (0) target = $region5
    $region4: #{tpu_custom_call.1} parent=1 // pred_region
      _
    $region5: #{tpu_custom_call.1} parent=1 // pred_fallthru
      _
    // Predicated region
    $region6: #{tpu_custom_call.1} parent=1 // pred_check
      _
    $region7: #{tpu_custom_call.1} parent=1 // pred_check_branch
      %22 = sbr.rel (0) target = $region9
    $region8: #{tpu_custom_call.1} parent=1 // pred_region
      _
    $region9: #{tpu_custom_call.1} parent=1 // pred_fallthru
      _
    // Predicated region
    $region10: #{tpu_custom_call.1} parent=1 // pred_check
      _
    $region11: #{tpu_custom_call.1} parent=1 // pred_check_branch
      %24 = sbr.rel (0) target = $region13
    $region12: #{tpu_custom_call.1} parent=1 // pred_region
      _
    $region13: #{tpu_custom_call.1} parent=1 // pred_fallthru
      _
    // Predicated region
    $region14: #{tpu_custom_call.1} parent=1 // pred_check
      _
    $region15: #{tpu_custom_call.1} parent=1 // pred_check_branch
      %26 = sbr.rel (0) target = $region17
    $region16: #{tpu_custom_call.1} parent=1 // pred_region
      _
    $region17: #{tpu_custom_call.1} parent=1 // pred_fallthru
      _
    // Predicated region
    $region18: #{tpu_custom_call.1} parent=1 // pred_check
      _
    $region19: #{tpu_custom_call.1} parent=1 // pred_check_branch
      %28 = sbr.rel (0) target = $region21
    $region20: #{tpu_custom_call.1} parent=1 // pred_region
      _
    $region21: #{tpu_custom_call.1} parent=1 // pred_fallthru
      _
    // Predicated region
    $region22: #{tpu_custom_call.1} parent=1 // pred_check
      _
    $region23: #{tpu_custom_call.1} parent=1 // pred_check_branch
      %30 = sbr.rel (0) target = $region25
    $region24: #{tpu_custom_call.1} parent=1 // pred_region
      _
    $region25: #{tpu_custom_call.1} parent=1 // pred_fallthru
      _
    // Predicated region
    $region26: #{tpu_custom_call.1} parent=1 // pred_check
      _
    $region27: #{tpu_custom_call.1} parent=1 // pred_check_branch
      %32 = sbr.rel (0) target = $region29
    $region28: #{tpu_custom_call.1} parent=1 // pred_region
      _
    $region29: #{tpu_custom_call.1} parent=1 // pred_fallthru
      _
    // Predicated region
    $region30: #{tpu_custom_call.1} parent=1 // pred_check
      _
    $region31: #{tpu_custom_call.1} parent=1 // pred_check_branch
      %34 = sbr.rel (0) target = $region33
    $region32: #{tpu_custom_call.1} parent=1 // pred_region
      _
    $region33: #{tpu_custom_call.1} parent=1 // pred_fallthru
      _
    // Predicated region
    $region34: #{tpu_custom_call.1} parent=1 // pred_check
      _
    $region35: #{tpu_custom_call.1} parent=1 // pred_check_branch
      %36 = sbr.rel (0) target = $region37
    $region36: #{tpu_custom_call.1} parent=1 // pred_region
      _
    $region37: #{tpu_custom_call.1} parent=1 // pred_fallthru
      _
    // Predicated region
    $region38: #{tpu_custom_call.1} parent=1 // pred_check
      _
    $region39: #{tpu_custom_call.1} parent=1 // pred_check_branch
      %38 = sbr.rel (0) target = $region41
    $region40: #{tpu_custom_call.1} parent=1 // pred_region
      _
    $region41: #{tpu_custom_call.1} parent=1 // pred_fallthru
      _
    // Predicated region
    $region42: #{tpu_custom_call.1} parent=1 // pred_check
      _
    $region43: #{tpu_custom_call.1} parent=1 // pred_check_branch
      %40 = sbr.rel (0) target = $region45
    $region44: #{tpu_custom_call.1} parent=1 // pred_region
      _
    $region45: #{tpu_custom_call.1} parent=1 // pred_fallthru
      _
    // Predicated region
    $region46: #{tpu_custom_call.1} parent=1 // pred_check
      _
    $region47: #{tpu_custom_call.1} parent=1 // pred_check_branch
      %42 = sbr.rel (0) target = $region49
    $region48: #{tpu_custom_call.1} parent=1 // pred_region
      _
    $region49: #{tpu_custom_call.1} parent=1 // pred_fallthru
      _
    // Predicated region
    $region50: #{tpu_custom_call.1} parent=1 // pred_check
      _
    $region51: #{tpu_custom_call.1} parent=1 // pred_check_branch
      %44 = sbr.rel (0) target = $region53
    $region52: #{tpu_custom_call.1} parent=1 // pred_region
      _
    $region53: #{tpu_custom_call.1} parent=1 // pred_fallthru
      _
    %v45 = vld [vmem:[%s0] sm:$0xff]
    %v46 = vld [vmem:[%s0 + $0x8] sm:$0xff]
    %v47 = vld [vmem:[%s1] sm:$0xff]
    %v48 = vld [vmem:[%s1 + $0x8] sm:$0xff]
    %v49 = vld [vmem:[%s4] sm:$0x3]
    %v50 = vld [vmem:[%s5] sm:$0x3]
    %v51 = vld [vmem:[%s6] sm:$0xff]
    %v52 = vld [vmem:[%s6 + $0x8] sm:$0xff]
    %v53 = vld [vmem:[%s6 + $0x10] sm:$0xff]
    %v54 = vld [vmem:[%s6 + $0x18] sm:$0xff]
    %v55 = vld [vmem:[%s6 + $0x20] sm:$0xff]
    %v56 = vld [vmem:[%s6 + $0x28] sm:$0xff]
    %v57 = vld [vmem:[%s6 + $0x30] sm:$0xff]
    %v58 = vld [vmem:[%s6 + $0x38] sm:$0xff]
    %vm59 = vcmask 261120
    %v61 = vsel %vm59, %v47, 0
    %v64 = vsel %vm59, %v48, 0
    %66 = vmatprep.subr.mxu0 0.0
    %67 = vmatpush1.msra.mxu0 %v55
    %68 = vmatprep.subr.mxu0 0.0
    %69 = vmatpush1.msra.mxu0 %v56
    %70 = vmatprep.subr.mxu0 0.0
    %71 = vmatpush1.msra.mxu0 %v57
    %72 = vmatprep.subr.mxu0 0.0
    %73 = vmatpush1.msra.mxu0 %v58
    %74 = vmatprep.subr.mxu0 0.0
    %75 = vmatpush1.msra.mxu0 0.0
    %76 = vmatprep.subr.mxu0 0.0
    %77 = vmatpush1.msra.mxu0 0.0
    %78 = vmatprep.subr.mxu0 0.0
    %79 = vmatpush1.msra.mxu0 0.0
    %80 = vmatprep.subr.mxu0 0.0
    %81 = vmatpush1.msra.mxu0 0.0
    %82 = vmatprep.subr.mxu0 0.0
    %83 = vmatpush1.msra.mxu0 0.0
    %84 = vmatprep.subr.mxu0 0.0
    %85 = vmatpush1.msra.mxu0 0.0
    %86 = vmatprep.subr.mxu0 0.0
    %87 = vmatpush1.msra.mxu0 0.0
    %88 = vmatprep.subr.mxu0 0.0
    %89 = vmatpush1.msra.mxu0 0.0
    %90 = vmatprep.subr.mxu0 0.0
    %91 = vmatpush1.msra.mxu0 0.0
    %92 = vmatprep.subr.mxu0 0.0
    %93 = vmatpush1.msra.mxu0 0.0
    %94 = vmatprep.subr.mxu0 0.0
    %95 = vmatpush1.msra.mxu0 0.0
    %96 = vmatprep.subr.mxu0 0.0
    %97 = vmatpush1.msra.mxu0 0.0
    %98 = vmatprep.subr.mxu0 0.0
    %99 = vmatpush1.msra.mxu0 0.0
    %100 = vmatprep.subr.mxu0 0.0
    %101 = vmatpush1.msra.mxu0 0.0
    %102 = vmatprep.subr.mxu0 0.0
    %103 = vmatpush1.msra.mxu0 0.0
    %104 = vmatprep.subr.mxu0 0.0
    %105 = vmatpush1.msra.mxu0 0.0
    %106 = vmatprep.subr.mxu0 0.0
    %107 = vmatpush1.msra.mxu0 0.0
    %108 = vmatprep.subr.mxu0 0.0
    %109 = vmatpush1.msra.mxu0 0.0
    %110 = vmatprep.subr.mxu0 0.0
    %111 = vmatpush1.msra.mxu0 0.0
    %112 = vmatprep.subr.mxu0 0.0
    %113 = vmatpush1.msra.mxu0 0.0
    %114 = vmatprep.subr.mxu0 0.0
    %115 = vmatpush1.msra.mxu0 0.0
    %116 = vmatprep.subr.mxu0 0.0
    %117 = vmatpush1.msra.mxu0 0.0
    %118 = vmatprep.subr.mxu0 0.0
    %119 = vmatpush1.msra.mxu0 0.0
    %120 = vmatprep.subr.mxu0 0.0
    %121 = vmatpush1.msra.mxu0 0.0
    %122 = vmatprep.subr.mxu0 0.0
    %123 = vmatpush1.msra.mxu0 0.0
    %124 = vmatprep.subr.mxu0 0.0
    %125 = vmatpush1.msra.mxu0 0.0
    %126 = vmatprep.subr.mxu0 0.0
    %127 = vmatpush1.msra.mxu0 0.0
    %128 = vmatprep.subr.mxu0 0.0
    %129 = vmatpush1.msra.mxu0 0.0
    %130 = vmatprep.mubr.f32.mxu0 0.0
    %131 = vmatmul.mubr.f32.gmra.mrb[0].mxu0 %v61
    %v132 = vpop.f32.mrb[0].mxu0
    %v133 = vadd.f32 0.0, %v132
    %v134 = vpop.f32.mrb[0].mxu0
    %135 = vmatprep.mubr.f32.mxu0 0.0
    %136 = vmatmul.mubr.f32.gmra.mrb[0].mxu0 %v64
    %v137 = vpop.f32.mrb[0].mxu0
    %v138 = vadd.f32 0.0, %v137
    %v139 = vpop.f32.mrb[0].mxu0
    %140 = vdwg.mxu0
    %v142 = vsel %vm59, %v45, 0
    %v145 = vsel %vm59, %v46, 0
    %147 = vmatprep.subr.mxu0 0.0
    %148 = vmatpush1.msra.mxu0 %v51
    %149 = vmatprep.subr.mxu0 0.0
    %150 = vmatpush1.msra.mxu0 %v52
    %151 = vmatprep.subr.mxu0 0.0
    %152 = vmatpush1.msra.mxu0 %v53
    %153 = vmatprep.subr.mxu0 0.0
    %154 = vmatpush1.msra.mxu0 %v54
    %155 = vmatprep.subr.mxu0 0.0
    %156 = vmatpush1.msra.mxu0 0.0
    %157 = vmatprep.subr.mxu0 0.0
    %158 = vmatpush1.msra.mxu0 0.0
    %159 = vmatprep.subr.mxu0 0.0
    %160 = vmatpush1.msra.mxu0 0.0
    %161 = vmatprep.subr.mxu0 0.0
    %162 = vmatpush1.msra.mxu0 0.0
    %163 = vmatprep.subr.mxu0 0.0
    %164 = vmatpush1.msra.mxu0 0.0
    %165 = vmatprep.subr.mxu0 0.0
    %166 = vmatpush1.msra.mxu0 0.0
    %167 = vmatprep.subr.mxu0 0.0
    %168 = vmatpush1.msra.mxu0 0.0
    %169 = vmatprep.subr.mxu0 0.0
    %170 = vmatpush1.msra.mxu0 0.0
    %171 = vmatprep.subr.mxu0 0.0
    %172 = vmatpush1.msra.mxu0 0.0
    %173 = vmatprep.subr.mxu0 0.0
    %174 = vmatpush1.msra.mxu0 0.0
    %175 = vmatprep.subr.mxu0 0.0
    %176 = vmatpush1.msra.mxu0 0.0
    %177 = vmatprep.subr.mxu0 0.0
    %178 = vmatpush1.msra.mxu0 0.0
    %179 = vmatprep.subr.mxu0 0.0
    %180 = vmatpush1.msra.mxu0 0.0
    %181 = vmatprep.subr.mxu0 0.0
    %182 = vmatpush1.msra.mxu0 0.0
    %183 = vmatprep.subr.mxu0 0.0
    %184 = vmatpush1.msra.mxu0 0.0
    %185 = vmatprep.subr.mxu0 0.0
    %186 = vmatpush1.msra.mxu0 0.0
    %187 = vmatprep.subr.mxu0 0.0
    %188 = vmatpush1.msra.mxu0 0.0
    %189 = vmatprep.subr.mxu0 0.0
    %190 = vmatpush1.msra.mxu0 0.0
    %191 = vmatprep.subr.mxu0 0.0
    %192 = vmatpush1.msra.mxu0 0.0
    %193 = vmatprep.subr.mxu0 0.0
    %194 = vmatpush1.msra.mxu0 0.0
    %195 = vmatprep.subr.mxu0 0.0
    %196 = vmatpush1.msra.mxu0 0.0
    %197 = vmatprep.subr.mxu0 0.0
    %198 = vmatpush1.msra.mxu0 0.0
    %199 = vmatprep.subr.mxu0 0.0
    %200 = vmatpush1.msra.mxu0 0.0
    %201 = vmatprep.subr.mxu0 0.0
    %202 = vmatpush1.msra.mxu0 0.0
    %203 = vmatprep.subr.mxu0 0.0
    %204 = vmatpush1.msra.mxu0 0.0
    %205 = vmatprep.subr.mxu0 0.0
    %206 = vmatpush1.msra.mxu0 0.0
    %207 = vmatprep.subr.mxu0 0.0
    %208 = vmatpush1.msra.mxu0 0.0
    %209 = vmatprep.subr.mxu0 0.0
    %210 = vmatpush1.msra.mxu0 0.0
    %211 = vmatprep.mubr.f32.mxu0 0.0
    %212 = vmatmul.mubr.f32.gmra.mrb[0].mxu0 %v142
    %v213 = vpop.f32.mrb[0].mxu0
    %v214 = vadd.f32 %v133, %v213
    %v215 = vpop.f32.mrb[0].mxu0
    %216 = vmatprep.mubr.f32.mxu0 0.0
    %217 = vmatmul.mubr.f32.gmra.mrb[0].mxu0 %v145
    %v218 = vpop.f32.mrb[0].mxu0
    %v219 = vadd.f32 %v138, %v218
    %v220 = vpop.f32.mrb[0].mxu0
    %221 = vdwg.mxu0
    %v222 = vxor.u32 %v214, 2147483648
    %v223 = vxor.u32 %v219, 2147483648
    %v224 = vmul.f32 %v222, 1.442695
    %v225 = vpow.pop %v224
    %v226 = vmul.f32 %v223, 1.442695
    %v227 = vpow.pop %v226
    %v228 = vadd.f32 %v225, 1.0
    %v229 = vadd.f32 %v227, 1.0
    %v230 = vrcp.pop %v228
    %v231 = vmul.f32 1.0, %v230
    %v232 = vrcp.pop %v229
    %v233 = vmul.f32 1.0, %v232
    %v234 = vmul.f32 %v231, %v45
    %v235 = vmul.f32 %v233, %v46
    %v236 = vsub.f32 1.0, %v231
    %v237 = vsub.f32 1.0, %v233
    %v238 = vmul.f32 %v236, %v47
    %v239 = vmul.f32 %v237, %v48
    %v240 = vadd.f32 %v234, %v238
    %v241 = vadd.f32 %v235, %v239
    %v242 = vlaneseq
    %v243 = vshrl.u32 %v242, 7
    %v244 = vsub.s32 0, %v243
    %v245 = vrot.slane %v50, %v244
    %247 = vbcast.lane.b32.xlu0 %v245, 256
    %v248 = vpop.permute.xlu0 %247
    %v249 = vlaneseq
    %v250 = vshrl.u32 %v249, 7
    %v251 = vsub.s32 1, %v250
    %v252 = vrot.slane %v50, %v251
    %254 = vbcast.lane.b32.xlu0 %v252, 256
    %v255 = vpop.permute.xlu0 %254
    %v256 = vmul.f32 %v240, %v248
    %v257 = vmul.f32 %v241, %v255
    %v258 = vsel %vm59, %v256, 0.0
    %v259 = vrot.slane %v258, 4
    %v260 = vadd.f32 %v258, %v259
    %v261 = vrot.slane %v260, 2
    %v262 = vadd.f32 %v260, %v261
    %v263 = vrot.slane %v262, 1
    %v264 = vadd.f32 %v262, %v263
    %v265 = vsel %vm59, %v257, 0.0
    %v266 = vrot.slane %v265, 4
    %v267 = vadd.f32 %v265, %v266
    %v268 = vrot.slane %v267, 2
    %v269 = vadd.f32 %v267, %v268
    %v270 = vrot.slane %v269, 1
    %v271 = vadd.f32 %v269, %v270
    %vm272 = vcmask 58368
    %v273 = vsel %vm272, %v49, 0.0
    %274 = vadd.xlane.f32.xlu0 %v273
    %v275 = vpop.xlane.xlu0 %274
    %v276 = vmax.f32 %v275, 1.0
    %v277 = vld [vmem:[%s2] sm:$0xff]
    %v278 = vld [vmem:[%s2 + $0x8] sm:$0xff]
    %v279 = vlaneseq
    %v280 = vshrl.u32 %v279, 7
    %v281 = vsub.s32 0, %v280
    %v282 = vrot.slane %v49, %v281
    %284 = vbcast.lane.b32.xlu0 %v282, 256
    %v285 = vpop.permute.xlu0 %284
    %v286 = vlaneseq
    %v287 = vshrl.u32 %v286, 7
    %v288 = vsub.s32 1, %v287
    %v289 = vrot.slane %v49, %v288
    %291 = vbcast.lane.b32.xlu0 %v289, 256
    %v292 = vpop.permute.xlu0 %291
    %v293 = vmul.f32 %v277, %v285
    %v294 = vmul.f32 %v278, %v292
    %v295 = vsel %vm59, %v293, 0.0
    %v296 = vrot.slane %v295, 4
    %v297 = vadd.f32 %v295, %v296
    %v298 = vrot.slane %v297, 2
    %v299 = vadd.f32 %v297, %v298
    %v300 = vrot.slane %v299, 1
    %v301 = vadd.f32 %v299, %v300
    %v302 = vsel %vm59, %v294, 0.0
    %v303 = vrot.slane %v302, 4
    %v304 = vadd.f32 %v302, %v303
    %v305 = vrot.slane %v304, 2
    %v306 = vadd.f32 %v304, %v305
    %v307 = vrot.slane %v306, 1
    %v308 = vadd.f32 %v306, %v307
    %v310 = vrot.slane %v276, 1
    %v313 = vrcp.pop %v276
    %v314 = vmul.f32 %v301, %v313
    %v315 = vrcp.pop %v310
    %v316 = vmul.f32 %v308, %v315
    %v317 = vld [vmem:[%s3] sm:$0xff]
    %v318 = vadd.f32 %v240, %v317
    %v319 = vadd.f32 %v241, %v317
    %v320 = vld [vmem:[%s7] sm:$0xff]
    %v321 = vld [vmem:[%s7 + $0x8] sm:$0xff]
    %v322 = vld [vmem:[%s7 + $0x10] sm:$0xff]
    %v323 = vld [vmem:[%s7 + $0x18] sm:$0xff]
    %v325 = vsel %vm59, %v318, 0
    %v328 = vsel %vm59, %v319, 0
    %330 = vmatprep.subr.mxu0 0.0
    %331 = vmatpush1.msra.mxu0 %v320
    %332 = vmatprep.subr.mxu0 0.0
    %333 = vmatpush1.msra.mxu0 %v321
    %334 = vmatprep.subr.mxu0 0.0
    %335 = vmatpush1.msra.mxu0 %v322
    %336 = vmatprep.subr.mxu0 0.0
    %337 = vmatpush1.msra.mxu0 %v323
    %338 = vmatprep.subr.mxu0 0.0
    %339 = vmatpush1.msra.mxu0 0.0
    %340 = vmatprep.subr.mxu0 0.0
    %341 = vmatpush1.msra.mxu0 0.0
    %342 = vmatprep.subr.mxu0 0.0
    %343 = vmatpush1.msra.mxu0 0.0
    %344 = vmatprep.subr.mxu0 0.0
    %345 = vmatpush1.msra.mxu0 0.0
    %346 = vmatprep.subr.mxu0 0.0
    %347 = vmatpush1.msra.mxu0 0.0
    %348 = vmatprep.subr.mxu0 0.0
    %349 = vmatpush1.msra.mxu0 0.0
    %350 = vmatprep.subr.mxu0 0.0
    %351 = vmatpush1.msra.mxu0 0.0
    %352 = vmatprep.subr.mxu0 0.0
    %353 = vmatpush1.msra.mxu0 0.0
    %354 = vmatprep.subr.mxu0 0.0
    %355 = vmatpush1.msra.mxu0 0.0
    %356 = vmatprep.subr.mxu0 0.0
    %357 = vmatpush1.msra.mxu0 0.0
    %358 = vmatprep.subr.mxu0 0.0
    %359 = vmatpush1.msra.mxu0 0.0
    %360 = vmatprep.subr.mxu0 0.0
    %361 = vmatpush1.msra.mxu0 0.0
    %362 = vmatprep.subr.mxu0 0.0
    %363 = vmatpush1.msra.mxu0 0.0
    %364 = vmatprep.subr.mxu0 0.0
    %365 = vmatpush1.msra.mxu0 0.0
    %366 = vmatprep.subr.mxu0 0.0
    %367 = vmatpush1.msra.mxu0 0.0
    %368 = vmatprep.subr.mxu0 0.0
    %369 = vmatpush1.msra.mxu0 0.0
    %370 = vmatprep.subr.mxu0 0.0
    %371 = vmatpush1.msra.mxu0 0.0
    %372 = vmatprep.subr.mxu0 0.0
    %373 = vmatpush1.msra.mxu0 0.0
    %374 = vmatprep.subr.mxu0 0.0
    %375 = vmatpush1.msra.mxu0 0.0
    %376 = vmatprep.subr.mxu0 0.0
    %377 = vmatpush1.msra.mxu0 0.0
    %378 = vmatprep.subr.mxu0 0.0
    %379 = vmatpush1.msra.mxu0 0.0
    %380 = vmatprep.subr.mxu0 0.0
    %381 = vmatpush1.msra.mxu0 0.0
    %382 = vmatprep.subr.mxu0 0.0
    %383 = vmatpush1.msra.mxu0 0.0
    %384 = vmatprep.subr.mxu0 0.0
    %385 = vmatpush1.msra.mxu0 0.0
    %386 = vmatprep.subr.mxu0 0.0
    %387 = vmatpush1.msra.mxu0 0.0
    %388 = vmatprep.subr.mxu0 0.0
    %389 = vmatpush1.msra.mxu0 0.0
    %390 = vmatprep.subr.mxu0 0.0
    %391 = vmatpush1.msra.mxu0 0.0
    %392 = vmatprep.subr.mxu0 0.0
    %393 = vmatpush1.msra.mxu0 0.0
    %394 = vmatprep.mubr.f32.mxu0 0.0
    %395 = vmatmul.mubr.f32.gmra.mrb[0].mxu0 %v325
    %v396 = vpop.f32.mrb[0].mxu0
    %v397 = vadd.f32 0.0, %v396
    %v398 = vpop.f32.mrb[0].mxu0
    %399 = vmatprep.mubr.f32.mxu0 0.0
    %400 = vmatmul.mubr.f32.gmra.mrb[0].mxu0 %v328
    %v401 = vpop.f32.mrb[0].mxu0
    %v402 = vadd.f32 0.0, %v401
    %v403 = vpop.f32.mrb[0].mxu0
    %404 = vdwg.mxu0
    %v405 = vld [vmem:[%s8] sm:$0xff]
    %v406 = vld [vmem:[%s8 + $0x8] sm:$0xff]
    %v407 = vld [vmem:[%s8 + $0x10] sm:$0xff]
    %v408 = vld [vmem:[%s8 + $0x18] sm:$0xff]
    %v409 = vld [vmem:[%s9] sm:$0xff]
    %v410 = vld [vmem:[%s9 + $0x8] sm:$0xff]
    %v411 = vld [vmem:[%s9 + $0x10] sm:$0xff]
    %v412 = vld [vmem:[%s9 + $0x18] sm:$0xff]
    %v413 = vld [vmem:[%s10] sm:$0x1]
    %v415 = vlaneseq
    %v416 = vshrl.u32 %v415, 7
    %v417 = vsub.s32 0, %v416
    %v418 = vrot.slane %v413, %v417
    %vm422 = vcmask 1041409
    %v423 = vsel %vm422, %v271, %v264
    %v424 = vsel %vm59, %v423, 0
    %426 = vmatprep.subr.mxu0 0.0
    %427 = vmatpush1.msra.mxu0 %v409
    %428 = vmatprep.subr.mxu0 0.0
    %429 = vmatpush1.msra.mxu0 %v410
    %430 = vmatprep.subr.mxu0 0.0
    %431 = vmatpush1.msra.mxu0 %v411
    %432 = vmatprep.subr.mxu0 0.0
    %433 = vmatpush1.msra.mxu0 %v412
    %434 = vmatprep.subr.mxu0 0.0
    %435 = vmatpush1.msra.mxu0 0.0
    %436 = vmatprep.subr.mxu0 0.0
    %437 = vmatpush1.msra.mxu0 0.0
    %438 = vmatprep.subr.mxu0 0.0
    %439 = vmatpush1.msra.mxu0 0.0
    %440 = vmatprep.subr.mxu0 0.0
    %441 = vmatpush1.msra.mxu0 0.0
    %442 = vmatprep.subr.mxu0 0.0
    %443 = vmatpush1.msra.mxu0 0.0
    %444 = vmatprep.subr.mxu0 0.0
    %445 = vmatpush1.msra.mxu0 0.0
    %446 = vmatprep.subr.mxu0 0.0
    %447 = vmatpush1.msra.mxu0 0.0
    %448 = vmatprep.subr.mxu0 0.0
    %449 = vmatpush1.msra.mxu0 0.0
    %450 = vmatprep.subr.mxu0 0.0
    %451 = vmatpush1.msra.mxu0 0.0
    %452 = vmatprep.subr.mxu0 0.0
    %453 = vmatpush1.msra.mxu0 0.0
    %454 = vmatprep.subr.mxu0 0.0
    %455 = vmatpush1.msra.mxu0 0.0
    %456 = vmatprep.subr.mxu0 0.0
    %457 = vmatpush1.msra.mxu0 0.0
    %458 = vmatprep.subr.mxu0 0.0
    %459 = vmatpush1.msra.mxu0 0.0
    %460 = vmatprep.subr.mxu0 0.0
    %461 = vmatpush1.msra.mxu0 0.0
    %462 = vmatprep.subr.mxu0 0.0
    %463 = vmatpush1.msra.mxu0 0.0
    %464 = vmatprep.subr.mxu0 0.0
    %465 = vmatpush1.msra.mxu0 0.0
    %466 = vmatprep.subr.mxu0 0.0
    %467 = vmatpush1.msra.mxu0 0.0
    %468 = vmatprep.subr.mxu0 0.0
    %469 = vmatpush1.msra.mxu0 0.0
    %470 = vmatprep.subr.mxu0 0.0
    %471 = vmatpush1.msra.mxu0 0.0
    %472 = vmatprep.subr.mxu0 0.0
    %473 = vmatpush1.msra.mxu0 0.0
    %474 = vmatprep.subr.mxu0 0.0
    %475 = vmatpush1.msra.mxu0 0.0
    %476 = vmatprep.subr.mxu0 0.0
    %477 = vmatpush1.msra.mxu0 0.0
    %478 = vmatprep.subr.mxu0 0.0
    %479 = vmatpush1.msra.mxu0 0.0
    %480 = vmatprep.subr.mxu0 0.0
    %481 = vmatpush1.msra.mxu0 0.0
    %482 = vmatprep.subr.mxu0 0.0
    %483 = vmatpush1.msra.mxu0 0.0
    %484 = vmatprep.subr.mxu0 0.0
    %485 = vmatpush1.msra.mxu0 0.0
    %486 = vmatprep.subr.mxu0 0.0
    %487 = vmatpush1.msra.mxu0 0.0
    %488 = vmatprep.subr.mxu0 0.0
    %489 = vmatpush1.msra.mxu0 0.0
    %490 = vmatprep.mubr.f32.mxu0 0.0
    %491 = vmatmul.mubr.f32.gmra.mrb[0].mxu0 %v424
    %v492 = vpop.f32.mrb[0].mxu0
    %v493 = vadd.f32 %v418, %v492
    %v494 = vpop.f32.mrb[0].mxu0
    %495 = vdwg.mxu0
    %v498 = vrot.slane %v316, 7
    %v499 = vsel %vm422, %v498, %v314
    %v500 = vsel %vm59, %v499, 0
    %502 = vmatprep.subr.mxu0 0.0
    %503 = vmatpush1.msra.mxu0 %v405
    %504 = vmatprep.subr.mxu0 0.0
    %505 = vmatpush1.msra.mxu0 %v406
    %506 = vmatprep.subr.mxu0 0.0
    %507 = vmatpush1.msra.mxu0 %v407
    %508 = vmatprep.subr.mxu0 0.0
    %509 = vmatpush1.msra.mxu0 %v408
    %510 = vmatprep.subr.mxu0 0.0
    %511 = vmatpush1.msra.mxu0 0.0
    %512 = vmatprep.subr.mxu0 0.0
    %513 = vmatpush1.msra.mxu0 0.0
    %514 = vmatprep.subr.mxu0 0.0
    %515 = vmatpush1.msra.mxu0 0.0
    %516 = vmatprep.subr.mxu0 0.0
    %517 = vmatpush1.msra.mxu0 0.0
    %518 = vmatprep.subr.mxu0 0.0
    %519 = vmatpush1.msra.mxu0 0.0
    %520 = vmatprep.subr.mxu0 0.0
    %521 = vmatpush1.msra.mxu0 0.0
    %522 = vmatprep.subr.mxu0 0.0
    %523 = vmatpush1.msra.mxu0 0.0
    %524 = vmatprep.subr.mxu0 0.0
    %525 = vmatpush1.msra.mxu0 0.0
    %526 = vmatprep.subr.mxu0 0.0
    %527 = vmatpush1.msra.mxu0 0.0
    %528 = vmatprep.subr.mxu0 0.0
    %529 = vmatpush1.msra.mxu0 0.0
    %530 = vmatprep.subr.mxu0 0.0
    %531 = vmatpush1.msra.mxu0 0.0
    %532 = vmatprep.subr.mxu0 0.0
    %533 = vmatpush1.msra.mxu0 0.0
    %534 = vmatprep.subr.mxu0 0.0
    %535 = vmatpush1.msra.mxu0 0.0
    %536 = vmatprep.subr.mxu0 0.0
    %537 = vmatpush1.msra.mxu0 0.0
    %538 = vmatprep.subr.mxu0 0.0
    %539 = vmatpush1.msra.mxu0 0.0
    %540 = vmatprep.subr.mxu0 0.0
    %541 = vmatpush1.msra.mxu0 0.0
    %542 = vmatprep.subr.mxu0 0.0
    %543 = vmatpush1.msra.mxu0 0.0
    %544 = vmatprep.subr.mxu0 0.0
    %545 = vmatpush1.msra.mxu0 0.0
    %546 = vmatprep.subr.mxu0 0.0
    %547 = vmatpush1.msra.mxu0 0.0
    %548 = vmatprep.subr.mxu0 0.0
    %549 = vmatpush1.msra.mxu0 0.0
    %550 = vmatprep.subr.mxu0 0.0
    %551 = vmatpush1.msra.mxu0 0.0
    %552 = vmatprep.subr.mxu0 0.0
    %553 = vmatpush1.msra.mxu0 0.0
    %554 = vmatprep.subr.mxu0 0.0
    %555 = vmatpush1.msra.mxu0 0.0
    %556 = vmatprep.subr.mxu0 0.0
    %557 = vmatpush1.msra.mxu0 0.0
    %558 = vmatprep.subr.mxu0 0.0
    %559 = vmatpush1.msra.mxu0 0.0
    %560 = vmatprep.subr.mxu0 0.0
    %561 = vmatpush1.msra.mxu0 0.0
    %562 = vmatprep.subr.mxu0 0.0
    %563 = vmatpush1.msra.mxu0 0.0
    %564 = vmatprep.subr.mxu0 0.0
    %565 = vmatpush1.msra.mxu0 0.0
    %566 = vmatprep.mubr.f32.mxu0 0.0
    %567 = vmatmul.mubr.f32.gmra.mrb[0].mxu0 %v500
    %v568 = vpop.f32.mrb[0].mxu0
    %v569 = vadd.f32 %v493, %v568
    %v570 = vpop.f32.mrb[0].mxu0
    %571 = vdwg.mxu0
    %v574 = vunpack.c.l.s4 1966171168
    %v575 = vunpack.c.0.s8 %v574
    %v576 = vlaneseq
    %v577 = vshrl.u32 %v576, 7
    %v578 = vsub.s32 %v575, %v577
    %v579 = vrot.slane %v569, %v578
    %v580 = vcombine.high %v579, %v579
    %v582 = vunpack.c.l.s4 1966171168
    %v583 = vunpack.c.0.s8 %v582
    %v584 = vlaneseq
    %v585 = vshrl.u32 %v584, 7
    %v586 = vsub.s32 %v583, %v585
    %v587 = vrot.slane %v579, %v586
    %v589 = vunpack.c.l.s4 1966171168
    %v590 = vunpack.c.0.s8 %v589
    %v591 = vlaneseq
    %v592 = vshrl.u32 %v591, 7
    %v593 = vsub.s32 %v590, %v592
    %v594 = vrot.slane %v580, %v593
    %v595 = vlaneseq
    %v596 = vshrl.u32 %v595, 7
    %v597 = vsub.s32 0, %v596
    %v598 = vrot.slane %v587, %v597
    %v599 = vlaneseq
    %v600 = vshrl.u32 %v599, 7
    %v601 = vsub.s32 0, %v600
    %v602 = vrot.slane %v594, %v601
    %v605 = vadd.f32 %v397, %v598
    %v606 = vadd.f32 %v402, %v602
    %v607 = vxor.u32 %v605, 2147483648
    %v608 = vxor.u32 %v606, 2147483648
    %v609 = vmul.f32 %v607, 1.442695
    %v610 = vpow.pop %v609
    %v611 = vmul.f32 %v608, 1.442695
    %v612 = vpow.pop %v611
    %v613 = vadd.f32 %v610, 1.0
    %v614 = vadd.f32 %v612, 1.0
    %v615 = vrcp.pop %v613
    %v616 = vmul.f32 1.0, %v615
    %v617 = vrcp.pop %v614
    %v618 = vmul.f32 1.0, %v617
    %v619 = vld [vmem:[%s11] sm:$0x1]
    %v621 = vlaneseq
    %v622 = vshrl.u32 %v621, 7
    %v623 = vsub.s32 0, %v622
    %v624 = vrot.slane %v619, %v623
    %v626 = vmul.f32 %v616, %v624
    %v627 = vmul.f32 %v618, %v624
    %v628 = vsel %vm59, %v626, 0.0
    %629 = vadd.xlane.f32.xlu0 %v628
    %v630 = vpop.xlane.xlu0 %629
    %v631 = vsel %vm59, %v627, 0.0
    %632 = vadd.xlane.f32.xlu0 %v631
    %v633 = vpop.xlane.xlu0 %632
    %v635 = vlaneseq
    %v636 = vshrl.u32 %v635, 7
    %v637 = vsub.s32 0, %v636
    %v638 = vrot.slane %v49, %v637
    %640 = vbcast.lane.b32.xlu0 %v638, 256
    %v641 = vpop.permute.xlu0 %640
    %v642 = vlaneseq
    %v643 = vshrl.u32 %v642, 7
    %v644 = vsub.s32 1, %v643
    %v645 = vrot.slane %v49, %v644
    %647 = vbcast.lane.b32.xlu0 %v645, 256
    %v648 = vpop.permute.xlu0 %647
    %v651 = vmul.f32 %v630, %v641
    %v652 = vmul.f32 %v633, %v648
    %654 = vset.pattern.permute.xlu0 0
    %655 = vperm.xlu0 %654, %v651
    %v656 = vpop.permute.xlu0 %655
    %659 = vset.pattern.permute.xlu0 0
    %660 = vperm.xlu0 %659, %v652
    %v661 = vpop.permute.xlu0 %660
    %v663 = vmul.f32 %v656, %v318
    %v664 = vmul.f32 %v661, %v319
    %v665 = vsel %vm59, %v663, 0.0
    %v666 = vrot.slane %v665, 4
    %v667 = vadd.f32 %v665, %v666
    %v668 = vrot.slane %v667, 2
    %v669 = vadd.f32 %v667, %v668
    %v670 = vrot.slane %v669, 1
    %v671 = vadd.f32 %v669, %v670
    %v672 = vsel %vm59, %v664, 0.0
    %v673 = vrot.slane %v672, 4
    %v674 = vadd.f32 %v672, %v673
    %v675 = vrot.slane %v674, 2
    %v676 = vadd.f32 %v674, %v675
    %v677 = vrot.slane %v676, 1
    %v678 = vadd.f32 %v676, %v677
    %v679 = vld [vmem:[%s12] sm:$0xff]
    %v680 = vld [vmem:[%s12 + $0x8] sm:$0xff]
    %v681 = vld [vmem:[%s12 + $0x10] sm:$0xff]
    %v682 = vld [vmem:[%s12 + $0x18] sm:$0xff]
    %v683 = vld [vmem:[%s12 + $0x20] sm:$0xff]
    %v684 = vld [vmem:[%s12 + $0x28] sm:$0xff]
    %v685 = vld [vmem:[%s12 + $0x30] sm:$0xff]
    %v686 = vld [vmem:[%s12 + $0x38] sm:$0xff]
    %687 = vmatprep.subr.mxu0 0.0
    %688 = vmatpush1.msra.mxu0 %v683
    %689 = vmatprep.subr.mxu0 0.0
    %690 = vmatpush1.msra.mxu0 %v684
    %691 = vmatprep.subr.mxu0 0.0
    %692 = vmatpush1.msra.mxu0 %v685
    %693 = vmatprep.subr.mxu0 0.0
    %694 = vmatpush1.msra.mxu0 %v686
    %695 = vmatprep.subr.mxu0 0.0
    %696 = vmatpush1.msra.mxu0 0.0
    %697 = vmatprep.subr.mxu0 0.0
    %698 = vmatpush1.msra.mxu0 0.0
    %699 = vmatprep.subr.mxu0 0.0
    %700 = vmatpush1.msra.mxu0 0.0
    %701 = vmatprep.subr.mxu0 0.0
    %702 = vmatpush1.msra.mxu0 0.0
    %703 = vmatprep.subr.mxu0 0.0
    %704 = vmatpush1.msra.mxu0 0.0
    %705 = vmatprep.subr.mxu0 0.0
    %706 = vmatpush1.msra.mxu0 0.0
    %707 = vmatprep.subr.mxu0 0.0
    %708 = vmatpush1.msra.mxu0 0.0
    %709 = vmatprep.subr.mxu0 0.0
    %710 = vmatpush1.msra.mxu0 0.0
    %711 = vmatprep.subr.mxu0 0.0
    %712 = vmatpush1.msra.mxu0 0.0
    %713 = vmatprep.subr.mxu0 0.0
    %714 = vmatpush1.msra.mxu0 0.0
    %715 = vmatprep.subr.mxu0 0.0
    %716 = vmatpush1.msra.mxu0 0.0
    %717 = vmatprep.subr.mxu0 0.0
    %718 = vmatpush1.msra.mxu0 0.0
    %719 = vmatprep.subr.mxu0 0.0
    %720 = vmatpush1.msra.mxu0 0.0
    %721 = vmatprep.subr.mxu0 0.0
    %722 = vmatpush1.msra.mxu0 0.0
    %723 = vmatprep.subr.mxu0 0.0
    %724 = vmatpush1.msra.mxu0 0.0
    %725 = vmatprep.subr.mxu0 0.0
    %726 = vmatpush1.msra.mxu0 0.0
    %727 = vmatprep.subr.mxu0 0.0
    %728 = vmatpush1.msra.mxu0 0.0
    %729 = vmatprep.subr.mxu0 0.0
    %730 = vmatpush1.msra.mxu0 0.0
    %731 = vmatprep.subr.mxu0 0.0
    %732 = vmatpush1.msra.mxu0 0.0
    %733 = vmatprep.subr.mxu0 0.0
    %734 = vmatpush1.msra.mxu0 0.0
    %735 = vmatprep.subr.mxu0 0.0
    %736 = vmatpush1.msra.mxu0 0.0
    %737 = vmatprep.subr.mxu0 0.0
    %738 = vmatpush1.msra.mxu0 0.0
    %739 = vmatprep.subr.mxu0 0.0
    %740 = vmatpush1.msra.mxu0 0.0
    %741 = vmatprep.subr.mxu0 0.0
    %742 = vmatpush1.msra.mxu0 0.0
    %743 = vmatprep.subr.mxu0 0.0
    %744 = vmatpush1.msra.mxu0 0.0
    %745 = vmatprep.subr.mxu0 0.0
    %746 = vmatpush1.msra.mxu0 0.0
    %747 = vmatprep.subr.mxu0 0.0
    %748 = vmatpush1.msra.mxu0 0.0
    %749 = vmatprep.subr.mxu0 0.0
    %750 = vmatpush1.msra.mxu0 0.0
    %751 = vmatprep.mubr.f32.mxu0 0.0
    %752 = vmatmul.mubr.f32.gmra.mrb[0].mxu0 %v424
    %v753 = vpop.f32.mrb[0].mxu0
    %v754 = vadd.f32 0.0, %v753
    %v755 = vpop.f32.mrb[0].mxu0
    %756 = vdwg.mxu0
    %v759 = vsel %vm422, %v678, %v671
    %v760 = vsel %vm59, %v759, 0
    %762 = vmatprep.subr.mxu0 0.0
    %763 = vmatpush1.msra.mxu0 %v679
    %764 = vmatprep.subr.mxu0 0.0
    %765 = vmatpush1.msra.mxu0 %v680
    %766 = vmatprep.subr.mxu0 0.0
    %767 = vmatpush1.msra.mxu0 %v681
    %768 = vmatprep.subr.mxu0 0.0
    %769 = vmatpush1.msra.mxu0 %v682
    %770 = vmatprep.subr.mxu0 0.0
    %771 = vmatpush1.msra.mxu0 0.0
    %772 = vmatprep.subr.mxu0 0.0
    %773 = vmatpush1.msra.mxu0 0.0
    %774 = vmatprep.subr.mxu0 0.0
    %775 = vmatpush1.msra.mxu0 0.0
    %776 = vmatprep.subr.mxu0 0.0
    %777 = vmatpush1.msra.mxu0 0.0
    %778 = vmatprep.subr.mxu0 0.0
    %779 = vmatpush1.msra.mxu0 0.0
    %780 = vmatprep.subr.mxu0 0.0
    %781 = vmatpush1.msra.mxu0 0.0
    %782 = vmatprep.subr.mxu0 0.0
    %783 = vmatpush1.msra.mxu0 0.0
    %784 = vmatprep.subr.mxu0 0.0
    %785 = vmatpush1.msra.mxu0 0.0
    %786 = vmatprep.subr.mxu0 0.0
    %787 = vmatpush1.msra.mxu0 0.0
    %788 = vmatprep.subr.mxu0 0.0
    %789 = vmatpush1.msra.mxu0 0.0
    %790 = vmatprep.subr.mxu0 0.0
    %791 = vmatpush1.msra.mxu0 0.0
    %792 = vmatprep.subr.mxu0 0.0
    %793 = vmatpush1.msra.mxu0 0.0
    %794 = vmatprep.subr.mxu0 0.0
    %795 = vmatpush1.msra.mxu0 0.0
    %796 = vmatprep.subr.mxu0 0.0
    %797 = vmatpush1.msra.mxu0 0.0
    %798 = vmatprep.subr.mxu0 0.0
    %799 = vmatpush1.msra.mxu0 0.0
    %800 = vmatprep.subr.mxu0 0.0
    %801 = vmatpush1.msra.mxu0 0.0
    %802 = vmatprep.subr.mxu0 0.0
    %803 = vmatpush1.msra.mxu0 0.0
    %804 = vmatprep.subr.mxu0 0.0
    %805 = vmatpush1.msra.mxu0 0.0
    %806 = vmatprep.subr.mxu0 0.0
    %807 = vmatpush1.msra.mxu0 0.0
    %808 = vmatprep.subr.mxu0 0.0
    %809 = vmatpush1.msra.mxu0 0.0
    %810 = vmatprep.subr.mxu0 0.0
    %811 = vmatpush1.msra.mxu0 0.0
    %812 = vmatprep.subr.mxu0 0.0
    %813 = vmatpush1.msra.mxu0 0.0
    %814 = vmatprep.subr.mxu0 0.0
    %815 = vmatpush1.msra.mxu0 0.0
    %816 = vmatprep.subr.mxu0 0.0
    %817 = vmatpush1.msra.mxu0 0.0
    %818 = vmatprep.subr.mxu0 0.0
    %819 = vmatpush1.msra.mxu0 0.0
    %820 = vmatprep.subr.mxu0 0.0
    %821 = vmatpush1.msra.mxu0 0.0
    %822 = vmatprep.subr.mxu0 0.0
    %823 = vmatpush1.msra.mxu0 0.0
    %824 = vmatprep.subr.mxu0 0.0
    %825 = vmatpush1.msra.mxu0 0.0
    %826 = vmatprep.mubr.f32.mxu0 0.0
    %827 = vmatmul.mubr.f32.gmra.mrb[0].mxu0 %v760
    %v828 = vpop.f32.mrb[0].mxu0
    %v829 = vadd.f32 %v754, %v828
    %v830 = vpop.f32.mrb[0].mxu0
    %831 = vdwg.mxu0
    %v832 = vxor.u32 %v829, 2147483648
    %v833 = vmul.f32 %v832, 1.442695
    %v834 = vpow.pop %v833
    %v835 = vadd.f32 %v834, 1.0
    %v836 = vrcp.pop %v835
    %v837 = vmul.f32 1.0, %v836
    %v838 = vmul.f32 %v837, 0.5
    %v840 = vmul.f32 %v838, %v423
    %v841 = vsub.f32 1.0, %v838
    %v843 = vmul.f32 %v841, %v759
    %v844 = vadd.f32 %v840, %v843
    %vm845 = vcmask 254976
    %846 = vst.msk [vmem:[#allocation2] sm:$0x3] %vm845, %v844
    // Predicated region
    $region54: #{tpu_custom_call.1} parent=1 // pred_check
      _
    $region55: #{tpu_custom_call.1} parent=1 // pred_check_branch
      %848 = sbr.rel (0) target = $region57
    $region56: #{tpu_custom_call.1} parent=1 // pred_region
      %s850 = ssub.s32 32, 32
      %851 = vsyncadd [#allocation3], %s850
      %s853 = sshll.u32 [#allocation2], 4
      %s854 = int_to_ptr.vmem [resolvable:$true] %s853
      %856 = dma.vmem_to_hbm [thread:$0]  %s854, 32, %s13, [#allocation3]
    $region57: #{tpu_custom_call.1} parent=1 // pred_fallthru
      _
    // Predicated region
    $region58: #{tpu_custom_call.1} parent=1 // pred_check
      _
    $region59: #{tpu_custom_call.1} parent=1 // pred_check_branch
      %858 = sbr.rel (0) target = $region61
    $region60: #{tpu_custom_call.1} parent=1 // pred_region
      %859 = dma.done [#allocation3], 32
    $region61: #{tpu_custom_call.1} parent=1 // pred_fallthru
      _
    %860 = vsyncpa [#allocation3], 1

</llo_original>
